<compile_context>
chip_gen: v5e
topology: v5e:2x2
jax: 0.10.0
libtpu: 0.0.40
codegen_flags: <defaults>
</compile_context>

<pallas_src>
import jax
import jax.numpy as jnp
from jax import lax
from jax.experimental import pallas as pl
from jax.experimental.pallas import tpu as pltpu

EPS = 1e-12  # matches torch.nn.functional.normalize default


def _l2norm_kernel(x_ref, o_ref):
    # Block = (1, C, tile_hw) or (1, C, tile_rows, 128).
    # Reduce over channels (axis=1): channels live above the (sublane, lane)
    # dims in the 4-D layout, so this is plain per-vreg VALU adds.
    x = x_ref[...].astype(jnp.float32)
    sumsq = jnp.sum(x * x, axis=1, keepdims=True)
    # F.normalize: x / max(||x||, eps) == x * rsqrt(max(sumsq, eps^2)).
    # Keep this in f32 — eps^2 = 1e-24 is a normal f32 but not a bf16.
    inv = lax.rsqrt(jnp.maximum(sumsq, EPS * EPS))  # EUP slot, nearly free
    o_ref[...] = (x * inv).astype(o_ref.dtype)


def _round_up(x, m):
    return ((x + m - 1) // m) * m


def _chip_f32_tile_budget():
    """Per-buffer tile budget in *f32 compute footprint* bytes."""
    try:
        vmem = getattr(pltpu.get_tpu_info(), "vmem_capacity_bytes", 128 << 20)
    except Exception:
        vmem = 128 << 20
    # v7x reports ~64 MiB/TC: use bigger tiles to amortize per-step overhead
    # at its 3.2 TB/s HBM BW. v5e/v6e (128 MiB): 4 MiB already ~85-90% roofline.
    return (6 << 20) if vmem <= (64 << 20) else (4 << 20)


def _vmem_limit_bytes(in_block_bytes, out_block_bytes, f32_block_bytes):
    # double-buffered in+out blocks + in-kernel f32 temporaries + slack,
    # capped at 48 MiB (safe on v7x's 64 MiB physical VMEM/TC).
    needed = 2 * (in_block_bytes + out_block_bytes) + 2 * f32_block_bytes + (4 << 20)
    return int(min(max(needed, 32 << 20), 48 << 20))


def _cost_estimate(N, C, HW, itemsize):
    return pl.CostEstimate(
        flops=3 * N * C * HW,              # square + accumulate + scale
        transcendentals=N * HW,            # one rsqrt per spatial column
        bytes_accessed=2 * N * C * HW * itemsize,
    )


def _l2norm_4d(x3d):
    """Preferred path: HW % 128 == 0. View HW as (rows, 128)."""
    N, C, HW = x3d.shape
    rows = HW // 128
    x4d = x3d.reshape(N, C, rows, 128)     # free view (splits the last dim)

    budget = _chip_f32_tile_budget()
    bytes_per_row_f32 = C * 128 * 4        # f32 footprint of one 128-lane row slab
    rows_budget = max(8, budget // bytes_per_row_f32)

    if rows <= rows_budget:
        tile_rows = rows                   # full extent: always a legal block dim
    else:
        n_steps = pl.cdiv(rows, rows_budget)
        tile_rows = min(_round_up(pl.cdiv(rows, n_steps), 8), rows)

    # v7x megacore: avoid a 1-block grid leaving a TensorCore idle.
    if N == 1 and pl.cdiv(rows, tile_rows) == 1 and rows >= 16:
        tile_rows = _round_up(pl.cdiv(rows, 2), 8)

    grid = (N, pl.cdiv(rows, tile_rows))
    block = (1, C, tile_rows, 128)
    itemsize = x3d.dtype.itemsize
    in_block_bytes = C * tile_rows * 128 * itemsize
    f32_block_bytes = C * tile_rows * 128 * 4

    y4d = pl.pallas_call(
        _l2norm_kernel,
        out_shape=jax.ShapeDtypeStruct((N, C, rows, 128), x3d.dtype),
        grid=grid,
        in_specs=[pl.BlockSpec(block, lambda n, j: (n, 0, j, 0))],
        out_specs=pl.BlockSpec(block, lambda n, j: (n, 0, j, 0)),
        compiler_params=pltpu.CompilerParams(
            dimension_semantics=("parallel", "parallel"),
            vmem_limit_bytes=_vmem_limit_bytes(
                in_block_bytes, in_block_bytes, f32_block_bytes),
        ),
        cost_estimate=_cost_estimate(N, C, HW, itemsize),
    )(x4d)
    return y4d.reshape(N, C, HW)


def _l2norm_3d(x3d):
    """Fallback path: HW not a multiple of 128 (masked partial last block)."""
    N, C, HW = x3d.shape
    budget = _chip_f32_tile_budget()
    bytes_per_col_f32 = C * 4
    max_cols = max(128, ((budget // bytes_per_col_f32) // 128) * 128)

    if HW <= max_cols:
        tile_hw = HW                       # full extent
    else:
        n_steps = pl.cdiv(HW, max_cols)
        tile_hw = min(_round_up(pl.cdiv(HW, n_steps), 128), max_cols)

    # v7x megacore: avoid a 1-block grid when cheap to split.
    if N == 1 and pl.cdiv(HW, tile_hw) == 1 and HW >= 256:
        tile_hw = _round_up(pl.cdiv(HW, 2), 128)

    grid = (N, pl.cdiv(HW, tile_hw))
    block = (1, C, tile_hw)
    itemsize = x3d.dtype.itemsize
    in_block_bytes = C * tile_hw * itemsize
    f32_block_bytes = C * tile_hw * 4

    return pl.pallas_call(
        _l2norm_kernel,
        out_shape=jax.ShapeDtypeStruct((N, C, HW), x3d.dtype),
        grid=grid,
        in_specs=[pl.BlockSpec(block, lambda n, j: (n, 0, j))],
        out_specs=pl.BlockSpec(block, lambda n, j: (n, 0, j)),
        compiler_params=pltpu.CompilerParams(
            dimension_semantics=("parallel", "parallel"),
            vmem_limit_bytes=_vmem_limit_bytes(
                in_block_bytes, in_block_bytes, f32_block_bytes),
        ),
        cost_estimate=_cost_estimate(N, C, HW, itemsize),
    )(x3d)


def l2norm(x_nchw, dim=1):
    """Equivalent of L2Norm(dim=1).forward(x) for NCHW inputs."""
    assert dim == 1, "this implementation normalizes over the channel dim"
    N, C, H, W = x_nchw.shape
    HW = H * W
    x3d = x_nchw.reshape(N, C, HW)         # free view, no data movement
    if HW % 128 == 0:
        y3d = _l2norm_4d(x3d)
    else:
        y3d = _l2norm_3d(x3d)
    return y3d.reshape(N, C, H, W)


if __name__ == "__main__":
    key = jax.random.PRNGKey(0)
    x = jax.random.normal(key, (2, 4, 16, 16), dtype=jnp.float32)

    y = jax.block_until_ready(l2norm(x, dim=1))

    # Reference in plain JAX (same semantics as F.normalize(p=2, dim=1)).
    norm = jnp.sqrt(jnp.sum(x * x, axis=1, keepdims=True))
    y_ref = x / jnp.maximum(norm, EPS)
    assert y.shape == x.shape and y.dtype == x.dtype
    assert jnp.allclose(y, y_ref, atol=1e-5, rtol=1e-5)

    print("KERNEL_OK")
</pallas_src>

<mosaic_0001>
module attributes {stable_mosaic.version = 11 : i64} {
  func.func @_l2norm_kernel(%arg0: i32, %arg1: i32, %arg2: memref<1x4x2x128xf32, #tpu.memory_space<vmem>>, %arg3: memref<1x4x2x128xf32, #tpu.memory_space<vmem>>) attributes {dimension_semantics = [#tpu.dimension_semantics<parallel>, #tpu.dimension_semantics<parallel>], iteration_bounds = array<i64: 2, 1>, scalar_prefetch = 0 : i64, scratch_operands = 0 : i64, tpu.core_type = #tpu.core_type<tc>, window_params = [{transform_indices = @transform_0, window_bounds = array<i64: 1, 4, 2, 128>}, {transform_indices = @transform_1, window_bounds = array<i64: 1, 4, 2, 128>}]} {
    %c0 = arith.constant 0 : index
    %c0_0 = arith.constant 0 : index
    %c0_1 = arith.constant 0 : index
    %c0_2 = arith.constant 0 : index
    %0 = vector.load %arg2[%c0, %c0_0, %c0_1, %c0_2] : memref<1x4x2x128xf32, #tpu.memory_space<vmem>>, vector<1x4x2x128xf32>
    %1 = arith.mulf %0, %0 : vector<1x4x2x128xf32>
    %cst = arith.constant dense<0.000000e+00> : vector<1x2x128xf32>
    %2 = vector.multi_reduction <add>, %1, %cst [1] : vector<1x4x2x128xf32> to vector<1x2x128xf32>
    %3 = vector.shape_cast %2 : vector<1x2x128xf32> to vector<1x1x2x128xf32>
    %cst_3 = arith.constant 1.000000e-24 : f32
    %4 = vector.broadcast %cst_3 : f32 to vector<1x1x2x128xf32>
    %5 = arith.maximumf %3, %4 : vector<1x1x2x128xf32>
    %6 = math.rsqrt %5 : vector<1x1x2x128xf32>
    %7 = vector.broadcast %6 : vector<1x1x2x128xf32> to vector<1x4x2x128xf32>
    %8 = arith.mulf %0, %7 : vector<1x4x2x128xf32>
    %c0_4 = arith.constant 0 : index
    %c0_5 = arith.constant 0 : index
    %c0_6 = arith.constant 0 : index
    %c0_7 = arith.constant 0 : index
    %9 = vector.load %arg3[%c0_4, %c0_5, %c0_6, %c0_7] : memref<1x4x2x128xf32, #tpu.memory_space<vmem>>, vector<1x4x2x128xf32>
    tpu.vector_store %arg3[%c0_4, %c0_5, %c0_6, %c0_7], %8 {strides = array<i32>} : memref<1x4x2x128xf32, #tpu.memory_space<vmem>>, vector<1x4x2x128xf32>,
    return
  }
  func.func @transform_0(%arg0: i32, %arg1: i32) -> (i32, i32, i32, i32) {
    %c0_i32 = arith.constant 0 : i32
    %c0_i32_0 = arith.constant 0 : i32
    %c0_i32_1 = arith.constant 0 : i32
    return %arg0, %c0_i32, %arg1, %c0_i32_0 : i32, i32, i32, i32
  }
  func.func @transform_1(%arg0: i32, %arg1: i32) -> (i32, i32, i32, i32) {
    %c0_i32 = arith.constant 0 : i32
    %c0_i32_0 = arith.constant 0 : i32
    %c0_i32_1 = arith.constant 0 : i32
    return %arg0, %c0_i32, %arg1, %c0_i32_0 : i32, i32, i32, i32
  }
}

</mosaic_0001>

<llo_original>
// kernel: tpu_custom_call.1
$region0: #{tpu_custom_call.1}
  #allocation0 [shape = 'u32[]', space=smem, size = 0x4, offset = 0x4, fixed_abs, tag = 'smem constant byte address 0x4 - core index']
  #allocation1 [shape = 'u32[72,128]{1,0:T(1,128)}', space=vmem, size = 0x9000, scoped, tag = 'internal scratch']
  %s0 = inlined_call_operand.hbm [shape: f32[2,4,2,128], index: 0, kind: input, shape index: {}]
  %s1 = inlined_call_operand.hbm [shape: f32[2,4,2,128], index: 1, kind: output, shape index: {}]
  %s2 = sld [smem:[#allocation0]]
  $region41: #{tpu_custom_call.1} parent=0
    _
  %s4 = ssub.s32 1, %s2
  %s5 = scalar_select 0, %s4, %s2
  $region1: #{tpu_custom_call.1} parent=0
    #allocation2 [shape = 'u8[8192]{0}', space=vmem, size = 0x2000, scoped, tag = 'input window, operand 0']
    #allocation3 [shape = 's32[2]{0}', space=sflag, size = 0x8, scoped, tag = 'scoped memory for tpu_custom_call.1']
    #allocation4 [shape = 's32[2]{0}', space=sflag, size = 0x8, scoped, tag = 'scoped memory for tpu_custom_call.1']
    #allocation5 [shape = 'u8[8192]{0}', space=vmem, size = 0x2000, scoped, tag = 'output window, operand 0']
    %6 = vsyncpa [#allocation3], 0
    %s7 = scalar_lea.sflag [#allocation3], 1
    %8 = vsyncpa %s7, 0
    %9 = vsyncpa [#allocation4], 0
    %s10 = scalar_lea.sflag [#allocation4], 1
    %11 = vsyncpa %s10, 0
    loop: start=0, step=1, limit=4
    $region2: #{tpu_custom_call.1} parent=1 // loop_pre_header
      _
    $region3: #{tpu_custom_call.1} parent=1 // loop_header
      %s13 = sphi 0, %s17
      %p14 = scmp.ge.s32.totalorder %s13, 4
      %s20 = sphi 0, %s32
      %s21 = sphi 0, %s28
      %s22 = sphi 0, %s20
      %s23 = sphi 0, %s21
      %s24 = sphi 0, %s22
      %s25 = sphi 0, %s23
      %s37 = sphi 0, %s39
      %s40 = sphi 0, %s37
      %s41 = sphi 0, %s40
      %s57 = sphi 0, %s41
      %s65 = sphi 0, %s67
      %s68 = sphi 0, %s65
      %s69 = sphi 0, %s68
      %s85 = sphi 0, %s69
    $region4: #{tpu_custom_call.1} parent=1 // loop_header_branch
      %16 = sbr.rel (%p14) target = $region8
    $region5: #{tpu_custom_call.1} parent=1 // loop_body
      %s18 = ssub.s32 %s13, 1
      %s19 = ssub.s32 %s13, 2
      %s26 = sadd.s32 1, %s21
      %p27 = scmp.ge.s32.totalorder %s26, 1
      %s28 = scalar_select %p27, 0, %s26
      %s29 = sadd.s32 1, %s20
      %s30 = scalar_select %p27, %s29, %s20
      %p31 = scmp.ge.s32.totalorder %s30, 2
      %s32 = scalar_select %p31, 0, %s30
      %s33 = ssub.s32 %s20, %s32
      %s34 = ssub.s32 %s21, %s28
      %s35 = sor.u32 %s33, %s34
      %p36 = scmp.eq.s32.totalorder %s35, 0
      %s38 = sadd.s32 %s37, 1
      %s39 = scalar_select %p36, %s37, %s38
      %p42 = pneg %p36
      %p43 = scmp.eq.s32.totalorder %s13, 1
      %p44 = por %p42, %p43
      %p45 = scmp.ne.s32.totalorder %s37, %s40
      %p46 = scmp.eq.s32.totalorder %s13, 0
      %p47 = por %p45, %p46
      %p48 = scmp.ne.s32.totalorder %s37, %s40
      %p49 = scmp.eq.s32.totalorder %s18, 1
      %p50 = por %p48, %p49
      %p51 = scmp.ne.s32.totalorder %s40, %s41
      %p52 = scmp.eq.s32.totalorder %s18, 0
      %p53 = por %p51, %p52
      %p54 = scmp.ne.s32.totalorder %s40, %s41
      %p55 = scmp.eq.s32.totalorder %s19, 1
      %p56 = por %p54, %p55
      %p58 = scmp.ne.s32.totalorder %s41, %s57
      %p59 = scmp.eq.s32.totalorder %s19, 0
      %p60 = por %p58, %p59
      %s61 = ssub.s32 %s20, %s32
      %s62 = ssub.s32 %s21, %s28
      %s63 = sor.u32 %s61, %s62
      %p64 = scmp.eq.s32.totalorder %s63, 0
      %s66 = sadd.s32 %s65, 1
      %s67 = scalar_select %p64, %s65, %s66
      %p70 = pneg %p64
      %p71 = scmp.eq.s32.totalorder %s13, 1
      %p72 = por %p70, %p71
      %p73 = scmp.ne.s32.totalorder %s65, %s68
      %p74 = scmp.eq.s32.totalorder %s13, 0
      %p75 = por %p73, %p74
      %p76 = scmp.ne.s32.totalorder %s65, %s68
      %p77 = scmp.eq.s32.totalorder %s18, 1
      %p78 = por %p76, %p77
      %p79 = scmp.ne.s32.totalorder %s68, %s69
      %p80 = scmp.eq.s32.totalorder %s18, 0
      %p81 = por %p79, %p80
      %p82 = scmp.ne.s32.totalorder %s68, %s69
      %p83 = scmp.eq.s32.totalorder %s19, 1
      %p84 = por %p82, %p83
      %p86 = scmp.ne.s32.totalorder %s69, %s85
      %p87 = scmp.eq.s32.totalorder %s19, 0
      %p88 = por %p86, %p87
      %p89 = scmp.le.s32.totalorder 1, %s13
      %p90 = scmp.lt.s32.totalorder %s13, 3
      %p91 = pnand %p89, %p90
      %p92 = pneg %p91
      // Predicated region
      $region9: #{tpu_custom_call.1} parent=5 // pred_check
        _
      $region10: #{tpu_custom_call.1} parent=5 // pred_check_branch
        %94 = sbr.rel (%p91) target = $region12
      $region11: #{tpu_custom_call.1} parent=5 // pred_region
        %s95 = ssub.s32 %s13, 1
      $region12: #{tpu_custom_call.1} parent=5 // pred_fallthru
        _
      %p96 = scmp.lt.s32.totalorder %s13, 2
      // Predicated region
      $region13: #{tpu_custom_call.1} parent=5 // pred_check
        %p97 = pneg %p96
      $region14: #{tpu_custom_call.1} parent=5 // pred_check_branch
        %99 = sbr.rel (%p97) target = $region16
      $region15: #{tpu_custom_call.1} parent=5 // pred_region
        // Predicated region
        $region17: #{tpu_custom_call.1} parent=15 // pred_check
          %p100 = pneg %p47
        $region18: #{tpu_custom_call.1} parent=15 // pred_check_branch
          %102 = sbr.rel (%p100) target = $region20
        $region19: #{tpu_custom_call.1} parent=15 // pred_region
          %s103 = sand.u32 %s37, 1
          %s104 = scalar_lea.sflag [#allocation3], %s103
          %s105 = sand.u32 %s37, 1
          %s106 = smul.addr %s105, 8
          %s107 = scalar_lea.vmem [#allocation2], %s106
          %109 = vsyncadd %s104, 0
          %s110 = smul.addr %s20, 4
          %s111 = sadd.s32 %s21, %s110
          %s112 = smul.addr %s111, 2
          %s113 = scalar_lea.hbm %s0, %s112
          %s114 = sshll.u32 %s113, 4
          %s115 = int_to_ptr.hbm [resolvable:$true] %s114
          %s116 = sshll.u32 %s107, 4
          %s117 = int_to_ptr.vmem [resolvable:$true] %s116
          %122 = dma.hbm_to_vmem [thread:$0]  %s115, 128, %s117, %s104, 32, 32, 2
        $region20: #{tpu_custom_call.1} parent=15 // pred_fallthru
          _
      $region16: #{tpu_custom_call.1} parent=5 // pred_fallthru
        _
      %p123 = scmp.le.s32.totalorder 1, %s13
      %p124 = scmp.lt.s32.totalorder %s13, 3
      %p125 = pnand %p123, %p124
      %p126 = pneg %p125
      // Predicated region
      $region21: #{tpu_custom_call.1} parent=5 // pred_check
        _
      $region22: #{tpu_custom_call.1} parent=5 // pred_check_branch
        %128 = sbr.rel (%p125) target = $region24
      $region23: #{tpu_custom_call.1} parent=5 // pred_region
        %s129 = ssub.s32 %s13, 1
        %s130 = sand.u32 %s40, 1
        %s131 = scalar_lea.sflag [#allocation3], %s130
        %s132 = sand.u32 %s40, 1
        %s133 = smul.addr %s132, 8
        %s134 = scalar_lea.vmem [#allocation2], %s133
        // Predicated region
        $region25: #{tpu_custom_call.1} parent=23 // pred_check
          %p135 = pneg %p53
        $region26: #{tpu_custom_call.1} parent=23 // pred_check_branch
          %137 = sbr.rel (%p135) target = $region28
        $region27: #{tpu_custom_call.1} parent=23 // pred_region
          %139 = dma.done %s131, 128
        $region28: #{tpu_custom_call.1} parent=23 // pred_fallthru
          _
        %s140 = sand.u32 %s40, 1
        %s141 = scalar_lea.sflag [#allocation3], %s140
        %s142 = sand.u32 %s40, 1
        %s143 = smul.addr %s142, 8
        %s144 = scalar_lea.vmem [#allocation2], %s143
        %p145 = pneg %p53
        %p146 = pneg %p50
        %p147 = pneg %p81
        %p148 = pneg %p78
        %s149 = sand.u32 %s68, 1
        %s150 = scalar_lea.sflag [#allocation4], %s149
        %s151 = sand.u32 %s68, 1
        %s152 = smul.addr %s151, 8
        %s153 = scalar_lea.vmem [#allocation5], %s152
        %v154 = vld [vmem:[%s134] sm:$0x3]
        %v155 = vld [vmem:[%s134 + $0x2] sm:$0x3]
        %v156 = vld [vmem:[%s134 + $0x4] sm:$0x3]
        %v157 = vld [vmem:[%s134 + $0x6] sm:$0x3]
        %v158 = vmul.f32 %v154, %v154
        %v159 = vmul.f32 %v155, %v155
        %v160 = vmul.f32 %v156, %v156
        %v161 = vmul.f32 %v157, %v157
        %vm162 = vcmask 1041408
        %v163 = vsel %vm162, %v158, 0.0
        %v164 = vsel %vm162, %v159, 0.0
        %v165 = vadd.f32 %v163, %v164
        %v166 = vsel %vm162, %v160, 0.0
        %v167 = vadd.f32 %v165, %v166
        %v168 = vsel %vm162, %v161, 0.0
        %v169 = vadd.f32 %v167, %v168
        %v170 = vmax.f32 %v169, 1e-24
        %v171 = vrsqrt.pop %v170
        %v172 = vmul.f32 %v171, %v170
        %v173 = vmul.f32 %v172, %v171
        %v174 = vmul.f32 0.5, %v173
        %v175 = vsub.f32 1.5, %v174
        %v176 = vmul.f32 %v171, %v175
        %vm177 = vweird.f32 %v170
        %vm178 = vweird.f32 %v171
        %vm179 = vmor %vm177, %vm178
        %v180 = vsel %vm179, %v171, %v176
        %v181 = vmul.f32 %v154, %v180
        %v182 = vmul.f32 %v155, %v180
        %v183 = vmul.f32 %v156, %v180
        %v184 = vmul.f32 %v157, %v180
        %185 = vst [vmem:[%s153] sm:$0x3] %v181
        %186 = vst [vmem:[%s153 + $0x2] sm:$0x3] %v182
        %187 = vst [vmem:[%s153 + $0x4] sm:$0x3] %v183
        %188 = vst [vmem:[%s153 + $0x6] sm:$0x3] %v184
        %s189 = sand.u32 %s68, 1
        %s190 = scalar_lea.sflag [#allocation4], %s189
        %s191 = sand.u32 %s68, 1
        %s192 = smul.addr %s191, 8
        %s193 = scalar_lea.vmem [#allocation5], %s192
        // Predicated region
        $region29: #{tpu_custom_call.1} parent=23 // pred_check
          %p194 = pneg %p78
        $region30: #{tpu_custom_call.1} parent=23 // pred_check_branch
          %196 = sbr.rel (%p194) target = $region32
        $region31: #{tpu_custom_call.1} parent=23 // pred_region
          %198 = vsyncadd %s190, 0
          %s199 = smul.addr %s22, 4
          %s200 = sadd.s32 %s23, %s199
          %s201 = smul.addr %s200, 2
          %s202 = scalar_lea.hbm %s1, %s201
          %s203 = sshll.u32 %s193, 4
          %s204 = int_to_ptr.vmem [resolvable:$true] %s203
          %s205 = sshll.u32 %s202, 4
          %s206 = int_to_ptr.hbm [resolvable:$true] %s205
          %211 = dma.vmem_to_hbm [thread:$0]  %s204, 128, %s206, %s190, 32, 32, 2
        $region32: #{tpu_custom_call.1} parent=23 // pred_fallthru
          _
      $region24: #{tpu_custom_call.1} parent=5 // pred_fallthru
        _
      %p212 = scmp.le.s32.totalorder 2, %s13
      // Predicated region
      $region33: #{tpu_custom_call.1} parent=5 // pred_check
        %p213 = pneg %p212
      $region34: #{tpu_custom_call.1} parent=5 // pred_check_branch
        %215 = sbr.rel (%p213) target = $region36
      $region35: #{tpu_custom_call.1} parent=5 // pred_region
        %s216 = ssub.s32 %s13, 2
        // Predicated region
        $region37: #{tpu_custom_call.1} parent=35 // pred_check
          %p217 = pneg %p84
        $region38: #{tpu_custom_call.1} parent=35 // pred_check_branch
          %219 = sbr.rel (%p217) target = $region40
        $region39: #{tpu_custom_call.1} parent=35 // pred_region
          %s220 = sand.u32 %s69, 1
          %s221 = scalar_lea.sflag [#allocation4], %s220
          %s222 = sand.u32 %s69, 1
          %s223 = smul.addr %s222, 8
          %s224 = scalar_lea.vmem [#allocation5], %s223
          %226 = dma.done %s221, 128
        $region40: #{tpu_custom_call.1} parent=35 // pred_fallthru
          _
      $region36: #{tpu_custom_call.1} parent=5 // pred_fallthru
        _
    $region6: #{tpu_custom_call.1} parent=1 // loop_footer
      %s17 = sadd.s32 1, %s13
    $region7: #{tpu_custom_call.1} parent=1 // loop_footer_branch
      %12 = sbr.rel target = $region3
    $region8: #{tpu_custom_call.1} parent=1 // loop_exit
      _
    %227 = vsyncpa [#allocation3], 1
    %s228 = scalar_lea.sflag [#allocation3], 1
    %229 = vsyncpa %s228, 1
    %230 = vsyncpa [#allocation4], 1
    %s231 = scalar_lea.sflag [#allocation4], 1
    %232 = vsyncpa %s231, 1

</llo_original>
